<compile_context>
chip_gen: v7x
topology: tpu7x:2x2x1
jax: 0.10.0
libtpu: 0.0.40
codegen_flags: <defaults>
</compile_context>

<pallas_src>
import functools

import jax
import jax.numpy as jnp
from jax.experimental import pallas as pl
from jax.experimental.pallas import tpu as pltpu


_VMEM_LIMIT_BYTES = 48 * 1024 * 1024   # explicit scoped-VMEM limit; leaves headroom even on v7x (64 MiB)
_BLOCK_TARGET_BYTES = 4 * 1024 * 1024  # per-block cap: >=512 lanes for typical C, ~16 MiB live in K3


def _pool_sum_kernel(x_ref, s_ref):
    """Accumulate per-channel spatial sums (f32) for one (batch-tile, HW-group)."""
    # x_ref: (b_tile, C, t_hw); s_ref: (b_tile, C, 1) f32, resident across the "arbitrary" HW axis.
    @pl.when(pl.program_id(2) == 0)
    def _():
        s_ref[...] = jnp.zeros_like(s_ref)

    # Sum with f32 accumulation instead of materializing a full f32 copy of the tile.
    s_ref[...] += jnp.sum(x_ref[...], axis=-1, keepdims=True, dtype=jnp.float32)


def _attn_fc_kernel(s_ref, wt_ref, b_ref, a_ref, *, inv_hw):
    """attn = sigmoid(mean @ W^T + b) for all batch elements at once (lane-dense matmul)."""
    # s_ref: (B, G, C) f32 partial sums; wt_ref: (C, C) = weight^T; b_ref: (1, C); a_ref: (B, C) f32.
    mean = jnp.sum(s_ref[...], axis=1) * inv_hw                                   # (B, C)
    logits = jnp.dot(mean, wt_ref[...], preferred_element_type=jnp.float32)       # (B, C)
    a_ref[...] = jax.nn.sigmoid(logits + b_ref[...])


def _scale_kernel(x_ref, a_ref, o_ref):
    """out = x * attn, computed in the input dtype (attn cast per tiny (C,1) block)."""
    # x_ref / o_ref: (b_tile, C, t_hw); a_ref: (b_tile, C, 1) f32.
    o_ref[...] = x_ref[...] * a_ref[...].astype(o_ref.dtype)


def channel_attention(x, weight, bias, *, hw_tile=None,
                      block_target_bytes=_BLOCK_TARGET_BYTES):
    """x: (B, C, H, W) NCHW; weight: (C, C) 1x1-conv weight; bias: (C,). Returns (B, C, H, W)."""
    B, C, H, W = x.shape
    HW = H * W
    itemsize = jnp.dtype(x.dtype).itemsize

    # ---- HW tile: multiple of 128 lanes, (C, t_hw) block capped at ~block_target_bytes ----
    if hw_tile is None:
        max_lanes = max(128, (block_target_bytes // max(1, C * itemsize)) // 128 * 128)
    else:
        max_lanes = max(128, (hw_tile // 128) * 128)
    hw_128 = pl.cdiv(HW, 128) * 128
    t_hw = min(hw_128, max_lanes)

    # ---- split HW tiles into G parallel groups (megacore utilization of the pooling pass) ----
    n_hw = pl.cdiv(HW, t_hw)
    g = 2 if n_hw >= 2 else 1
    t_steps = pl.cdiv(n_hw, g)        # HW tiles per group (reduction length of K1)
    n_hw = g * t_steps
    hw_p = n_hw * t_hw                # padded, lane-dense spatial extent

    # ---- fold batch elements per step when per-sample slabs are tiny ----
    b_tile = 1
    if n_hw == 1:
        slab = C * hw_p * itemsize
        for d in range(B, 0, -1):
            if B % d == 0 and d * slab <= block_target_bytes:
                b_tile = d
                break
    n_b = B // b_tile

    x_flat = x.reshape(B, C, HW)
    if hw_p != HW:                    # zero-pad: contributes 0 to sums, sliced off at the end
        x_flat = jnp.pad(x_flat, ((0, 0), (0, 0), (0, hw_p - HW)))

    # ---------------- Phase 1: global average pool (as f32 partial sums) ----------------
    sums = pl.pallas_call(
        _pool_sum_kernel,
        out_shape=jax.ShapeDtypeStruct((B, g, C, 1), jnp.float32),
        grid_spec=pltpu.PrefetchScalarGridSpec(
            num_scalar_prefetch=0,
            grid=(n_b, g, t_steps),
            in_specs=[
                pl.BlockSpec((b_tile, C, t_hw),
                             lambda b, gi, t: (b, 0, gi * t_steps + t)),
            ],
            out_specs=pl.BlockSpec((b_tile, pl.Squeezed(), C, 1),
                                   lambda b, gi, t: (b, gi, 0, 0)),
        ),
        compiler_params=pltpu.CompilerParams(
            dimension_semantics=("parallel", "parallel", "arbitrary"),
            vmem_limit_bytes=_VMEM_LIMIT_BYTES),
    )(x_flat)

    # ---------------- Phase 2: 1x1 conv on pooled means + sigmoid (single step) ----------------
    attn = pl.pallas_call(
        functools.partial(_attn_fc_kernel, inv_hw=1.0 / float(HW)),
        out_shape=jax.ShapeDtypeStruct((B, C), jnp.float32),
    )(sums.reshape(B, g, C),
      weight.astype(jnp.float32).T,          # pass W^T so the matmul is lane-dense
      bias.astype(jnp.float32).reshape(1, C))

    # ---------------- Phase 3: broadcast multiply in the input dtype ----------------
    out_flat = pl.pallas_call(
        _scale_kernel,
        out_shape=jax.ShapeDtypeStruct((B, C, hw_p), x.dtype),
        grid_spec=pltpu.PrefetchScalarGridSpec(
            num_scalar_prefetch=0,
            grid=(n_b, n_hw),
            in_specs=[
                pl.BlockSpec((b_tile, C, t_hw), lambda b, t: (b, 0, t)),
                pl.BlockSpec((b_tile, C, 1), lambda b, t: (b, 0, 0)),
            ],
            out_specs=pl.BlockSpec((b_tile, C, t_hw), lambda b, t: (b, 0, t)),
        ),
        compiler_params=pltpu.CompilerParams(
            dimension_semantics=("parallel", "parallel"),
            vmem_limit_bytes=_VMEM_LIMIT_BYTES),
    )(x_flat, attn.reshape(B, C, 1))

    if hw_p != HW:
        out_flat = out_flat[:, :, :HW]
    return out_flat.reshape(B, C, H, W)


def _reference(x, weight, bias):
    pooled = jnp.mean(x, axis=(2, 3))                       # (B, C)
    logits = pooled @ weight.T + bias[None, :]              # (B, C)
    attn = jax.nn.sigmoid(logits)[:, :, None, None]         # (B, C, 1, 1)
    return x * attn


if __name__ == "__main__":
    key = jax.random.PRNGKey(0)
    kx, kw, kb, kx2, kw2, kb2 = jax.random.split(key, 6)

    # Primary check: small shape consistent with the module (B=2, C=4, 16x16 spatial).
    B, C, H, W = 2, 4, 16, 16
    x = jax.random.normal(kx, (B, C, H, W), dtype=jnp.float32)
    weight = jax.random.normal(kw, (C, C), dtype=jnp.float32) * (1.0 / jnp.sqrt(C))
    bias = jax.random.normal(kb, (C,), dtype=jnp.float32) * 0.1

    out = channel_attention(x, weight, bias)
    jax.block_until_ready(out)
    ref = _reference(x, weight, bias)
    assert out.shape == x.shape and out.dtype == x.dtype
    assert jnp.allclose(out, ref, atol=1e-5, rtol=1e-5), "mismatch vs reference (case 1)"

    # Secondary check: non-multiple-of-128 spatial size with a forced small tile, exercising
    # the lane-padding, multi-tile and grouped-pooling (G=2) paths.
    B2, C2, H2, W2 = 2, 8, 20, 20
    x2 = jax.random.normal(kx2, (B2, C2, H2, W2), dtype=jnp.float32)
    weight2 = jax.random.normal(kw2, (C2, C2), dtype=jnp.float32) * (1.0 / jnp.sqrt(C2))
    bias2 = jax.random.normal(kb2, (C2,), dtype=jnp.float32) * 0.1

    out2 = channel_attention(x2, weight2, bias2, hw_tile=128)
    jax.block_until_ready(out2)
    ref2 = _reference(x2, weight2, bias2)
    assert jnp.allclose(out2, ref2, atol=1e-5, rtol=1e-5), "mismatch vs reference (case 2)"

    print("KERNEL_OK")
</pallas_src>

<mosaic_0001>
module attributes {stable_mosaic.version = 11 : i64} {
  func.func @_pool_sum_kernel(%arg0: i32, %arg1: i32, %arg2: i32, %arg3: memref<2x4x256xf32, #tpu.memory_space<vmem>>, %arg4: memref<2x1x4x1xf32, #tpu.memory_space<vmem>>) attributes {dimension_semantics = [#tpu.dimension_semantics<parallel>, #tpu.dimension_semantics<parallel>, #tpu.dimension_semantics<arbitrary>], iteration_bounds = array<i64: 1, 1, 1>, scalar_prefetch = 0 : i64, scratch_operands = 0 : i64, tpu.core_type = #tpu.core_type<tc>, window_params = [{transform_indices = @transform_0, window_bounds = array<i64: 2, 4, 256>}, {transform_indices = @transform_1, window_bounds = array<i64: 2, 1, 4, 1>}]} {
    %c0_i32 = arith.constant 0 : i32
    %0 = arith.cmpi eq, %arg2, %c0_i32 : i32
    %1 = arith.extui %0 : i1 to i32
    %c0_i32_0 = arith.constant 0 : i32
    %2 = arith.cmpi ne, %1, %c0_i32_0 : i32
    scf.if %2 {
      %cst_11 = arith.constant 0.000000e+00 : f32
      %12 = vector.broadcast %cst_11 : f32 to vector<2x4x1xf32>
      %c0_12 = arith.constant 0 : index
      %c0_13 = arith.constant 0 : index
      %c0_14 = arith.constant 0 : index
      %c0_15 = arith.constant 0 : index
      %13 = vector.load %arg4[%c0_12, %c0_13, %c0_14, %c0_15] : memref<2x1x4x1xf32, #tpu.memory_space<vmem>>, vector<2x1x4x1xf32>
      %14 = vector.shape_cast %13 : vector<2x1x4x1xf32> to vector<2x4x1xf32>
      %15 = vector.shape_cast %12 : vector<2x4x1xf32> to vector<2x1x4x1xf32>
      tpu.vector_store %arg4[%c0_12, %c0_13, %c0_14, %c0_15], %15 {strides = array<i32>} : memref<2x1x4x1xf32, #tpu.memory_space<vmem>>, vector<2x1x4x1xf32>,
    } else {
    }
    %c0 = arith.constant 0 : index
    %c0_1 = arith.constant 0 : index
    %c0_2 = arith.constant 0 : index
    %c0_3 = arith.constant 0 : index
    %3 = vector.load %arg4[%c0, %c0_1, %c0_2, %c0_3] : memref<2x1x4x1xf32, #tpu.memory_space<vmem>>, vector<2x1x4x1xf32>
    %4 = vector.shape_cast %3 : vector<2x1x4x1xf32> to vector<2x4x1xf32>
    %c0_4 = arith.constant 0 : index
    %c0_5 = arith.constant 0 : index
    %c0_6 = arith.constant 0 : index
    %5 = vector.load %arg3[%c0_4, %c0_5, %c0_6] : memref<2x4x256xf32, #tpu.memory_space<vmem>>, vector<2x4x256xf32>
    %cst = arith.constant dense<0.000000e+00> : vector<2x4xf32>
    %6 = vector.multi_reduction <add>, %5, %cst [2] : vector<2x4x256xf32> to vector<2x4xf32>
    %7 = vector.shape_cast %6 : vector<2x4xf32> to vector<2x4x1xf32>
    %8 = arith.addf %4, %7 : vector<2x4x1xf32>
    %c0_7 = arith.constant 0 : index
    %c0_8 = arith.constant 0 : index
    %c0_9 = arith.constant 0 : index
    %c0_10 = arith.constant 0 : index
    %9 = vector.load %arg4[%c0_7, %c0_8, %c0_9, %c0_10] : memref<2x1x4x1xf32, #tpu.memory_space<vmem>>, vector<2x1x4x1xf32>
    %10 = vector.shape_cast %9 : vector<2x1x4x1xf32> to vector<2x4x1xf32>
    %11 = vector.shape_cast %8 : vector<2x4x1xf32> to vector<2x1x4x1xf32>
    tpu.vector_store %arg4[%c0_7, %c0_8, %c0_9, %c0_10], %11 {strides = array<i32>} : memref<2x1x4x1xf32, #tpu.memory_space<vmem>>, vector<2x1x4x1xf32>,
    return
  }
  func.func @transform_0(%arg0: i32, %arg1: i32, %arg2: i32) -> (i32, i32, i32) {
    %c1_i32 = arith.constant 1 : i32
    %0 = arith.muli %arg1, %c1_i32 : i32
    %1 = arith.addi %0, %arg2 : i32
    %c0_i32 = arith.constant 0 : i32
    %c0_i32_0 = arith.constant 0 : i32
    return %arg0, %c0_i32, %1 : i32, i32, i32
  }
  func.func @transform_1(%arg0: i32, %arg1: i32, %arg2: i32) -> (i32, i32, i32, i32) {
    %c0_i32 = arith.constant 0 : i32
    %c0_i32_0 = arith.constant 0 : i32
    %c0_i32_1 = arith.constant 0 : i32
    return %arg0, %arg1, %c0_i32, %c0_i32_0 : i32, i32, i32, i32
  }
}

</mosaic_0001>

<llo_original>
// kernel: tpu_custom_call.1
$region0: #{tpu_custom_call.1}
  #allocation0 [shape = 'u32[]', space=smem, size = 0x4, offset = 0x4, fixed_abs, tag = 'smem constant byte address 0x4 - core index']
  #allocation1 [shape = 'u32[144,128]{1,0:T(1,128)}', space=vmem, size = 0x12000, scoped, tag = 'internal scratch']
  %s0 = inlined_call_operand.hbm [shape: f32[2,4,256], index: 0, kind: input, shape index: {}]
  %s1 = inlined_call_operand.vmem [shape: f32[2,1,4,1], index: 1, kind: output, shape index: {}]
  %s2 = sld [smem:[#allocation0]]
  $region22: #{tpu_custom_call.1} parent=0
    _
  %s4 = ssub.s32 1, %s2
  %s5 = scalar_select 0, %s4, %s2
  $region1: #{tpu_custom_call.1} parent=0
    #allocation2 [shape = 'u8[8192]{0}', space=vmem, size = 0x2000, scoped, tag = 'input window, operand 0, single buffered']
    #allocation3 [shape = 's32[1]{0}', space=sflag, size = 0x4, scoped, tag = 'scoped memory for tpu_custom_call.1']
    %6 = vsyncpa [#allocation3], 0
    // Predicated region
    $region2: #{tpu_custom_call.1} parent=1 // pred_check
      _
    $region3: #{tpu_custom_call.1} parent=1 // pred_check_branch
      %8 = sbr.rel (0) target = $region5
    $region4: #{tpu_custom_call.1} parent=1 // pred_region
      %s9 = sadd.s32 0, 0
      %s10 = smul.u32 2, %s9
      %s12 = ssub.s32 256, 256
      %13 = vsyncadd [#allocation3], %s12
      %s14 = smul.addr %s10, 64
      %s15 = scalar_lea.hbm %s0, %s14
      %s16 = sshll.u32 [#allocation2], 4
      %s17 = int_to_ptr.vmem [resolvable:$true] %s16
      %22 = dma.hbm_to_vmem [thread:$0]  %s15, 256, %s17, [#allocation3], 128, 128, 8
    $region5: #{tpu_custom_call.1} parent=1 // pred_fallthru
      _
    // Predicated region
    $region6: #{tpu_custom_call.1} parent=1 // pred_check
      _
    $region7: #{tpu_custom_call.1} parent=1 // pred_check_branch
      %24 = sbr.rel (0) target = $region9
    $region8: #{tpu_custom_call.1} parent=1 // pred_region
      %25 = dma.done [#allocation3], 256
    $region9: #{tpu_custom_call.1} parent=1 // pred_fallthru
      _
    %s26 = sadd.s32 0, 0
    %s27 = smul.u32 2, %s26
    %p28 = scmp.eq.s32.totalorder 0, 0
    // Predicated region
    $region10: #{tpu_custom_call.1} parent=1 // pred_check
      %p29 = pneg %p28
    $region11: #{tpu_custom_call.1} parent=1 // pred_check_branch
      %31 = sbr.rel (%p29) target = $region13
    $region12: #{tpu_custom_call.1} parent=1 // pred_region
      %vm32 = vcmask 3072
      %33 = vst.msk [vmem:[%s1] sm:$0xf] %vm32, 0.0
      %34 = vst.msk [vmem:[%s1 + $0x4] sm:$0xf] %vm32, 0.0
    $region13: #{tpu_custom_call.1} parent=1 // pred_fallthru
      _
    %v35 = vld [vmem:[%s1] sm:$0xf]
    %v36 = vld [vmem:[%s1 + $0x4] sm:$0xf]
    %v37 = vld [vmem:[#allocation2] sm:$0xff]
    %v38 = vld [vmem:[#allocation2 + $0x8] sm:$0xff]
    %v41 = vcombine.high %v37, %v37
    %v42 = vcombine.high %v38, %v38
    %vm45 = vcmask 1043456
    %v46 = vsel %vm45, %v37, 0.0
    %v47 = vsel %vm45, %v41, 0.0
    %v48 = vadd.f32 %v46, %v47
    %49 = vadd.xlane.f32.xlu0 %v48
    %v50 = vpop.xlane.xlu0 %49
    %v51 = vsel %vm45, %v38, 0.0
    %v52 = vsel %vm45, %v42, 0.0
    %v53 = vadd.f32 %v51, %v52
    %54 = vadd.xlane.f32.xlu0 %v53
    %v55 = vpop.xlane.xlu0 %54
    %v56 = vadd.f32 %v35, %v50
    %v57 = vadd.f32 %v36, %v55
    %vm58 = vcmask 3072
    %59 = vst.msk [vmem:[%s1] sm:$0xf] %vm58, %v56
    %60 = vst.msk [vmem:[%s1 + $0x4] sm:$0xf] %vm58, %v57
    // Predicated region
    $region14: #{tpu_custom_call.1} parent=1 // pred_check
      _
    $region15: #{tpu_custom_call.1} parent=1 // pred_check_branch
      %62 = sbr.rel (0) target = $region17
    $region16: #{tpu_custom_call.1} parent=1 // pred_region
      _
    $region17: #{tpu_custom_call.1} parent=1 // pred_fallthru
      _
    // Predicated region
    $region18: #{tpu_custom_call.1} parent=1 // pred_check
      _
    $region19: #{tpu_custom_call.1} parent=1 // pred_check_branch
      %64 = sbr.rel (0) target = $region21
    $region20: #{tpu_custom_call.1} parent=1 // pred_region
      _
    $region21: #{tpu_custom_call.1} parent=1 // pred_fallthru
      _
    %65 = vsyncpa [#allocation3], 1

</llo_original>
